<compile_context>
chip_gen: v7x
topology: tpu7x:2x2x1
jax: 0.10.0
libtpu: 0.0.40
codegen_flags: <defaults>
</compile_context>

<pallas_src>
import functools

import jax
import jax.numpy as jnp
from jax.experimental import pallas as pl
from jax.experimental.pallas import tpu as pltpu


def _round_up(v, m):
    return ((v + m - 1) // m) * m


# ----------------------------------------------------------------------------
# Fused Router kernel
# ----------------------------------------------------------------------------

def _router_kernel(x_ref,
                   sw1_ref, sb1_ref, sw2_ref, sb2_ref,
                   cw1_ref, cb1_ref, cw2_ref, cb2_ref,
                   fw1c_ref, fw1s_ref, fb1_ref,
                   fw2_ref, fb2_ref,
                   o_ref):
    # x may arrive in bf16 (halves the HBM streaming cost); upcast once and keep
    # every accumulation in f32.
    x = x_ref[...].astype(jnp.float32)                        # (TB, n, d)

    # Mean scaling (1/n for channel, 1/d for spatial) is folded into cw1 / sw1 in
    # the wrapper, so plain sums suffice here.
    channel_sum = jnp.sum(x, axis=1)                          # (TB, d)
    spatial_sum = jnp.sum(x, axis=2)                          # (TB, n)

    # spatial_router: Linear(n, n//r1) -> ReLU -> Linear(n//r1, path)
    s = jnp.dot(spatial_sum, sw1_ref[...],
                preferred_element_type=jnp.float32) + sb1_ref[...]
    s = jnp.maximum(s, 0.0)
    s = jnp.dot(s, sw2_ref[...],
                preferred_element_type=jnp.float32) + sb2_ref[...]       # (TB, path)

    # channel_router: Linear(dim, dim//r2) -> ReLU -> Linear(dim//r2, path)
    c = jnp.dot(channel_sum, cw1_ref[...],
                preferred_element_type=jnp.float32) + cb1_ref[...]
    c = jnp.maximum(c, 0.0)
    c = jnp.dot(c, cw2_ref[...],
                preferred_element_type=jnp.float32) + cb2_ref[...]       # (TB, path)

    # finnal_router on cat([channel, spatial]):
    #   cat([c, s]) @ Wf1 + bf1 == c @ Wf1[:path] + s @ Wf1[path:] + bf1
    w = (jnp.dot(c, fw1c_ref[...], preferred_element_type=jnp.float32)
         + jnp.dot(s, fw1s_ref[...], preferred_element_type=jnp.float32)
         + fb1_ref[...])
    w = jnp.maximum(w, 0.0)
    w = jnp.dot(w, fw2_ref[...],
                preferred_element_type=jnp.float32) + fb2_ref[...]       # (TB, path)

    # Softmax(dim=-1), numerically stable. Padded rows of a partial last batch
    # block may be garbage/NaN in-register, but they are masked on writeback.
    w = w - jnp.max(w, axis=-1, keepdims=True)
    e = jnp.exp(w)
    o_ref[...] = (e / jnp.sum(e, axis=-1, keepdims=True)).astype(o_ref.dtype)


# ----------------------------------------------------------------------------
# Wrapper: tile selection, VMEM budgeting, pallas_call
# ----------------------------------------------------------------------------

def _default_batch_tile():
    # v5e / v6e TensorCores have 128 MiB VMEM -> 256-row x tiles fit comfortably
    # double-buffered; v7x has 64 MiB per TC -> stay at 128 (~2 x 14 MiB buffers).
    try:
        vmem = pltpu.get_tpu_info().vmem_capacity_bytes
        if vmem >= (100 << 20):
            return 256
    except Exception:
        pass
    return 128


def _pick_batch_block(B, batch_tile):
    if batch_tile is None:
        batch_tile = _default_batch_tile()
    if B <= 8:
        return B                      # single full block
    # Guarantee >= 2 grid steps so the "parallel" batch axis can shard across both
    # v7x TensorCores; keep TB a multiple of 8 (output sublane-tiling rule).
    half = _round_up(pl.cdiv(B, 2), 8)
    return max(8, min(batch_tile, half))


def router_forward(params, x, *, batch_tile=None):
    """x: (B, n, dim) -> path weights (B, path, 1, 1), matching torch Router.forward."""
    B, n, d = x.shape
    path = params["fw2"].shape[-1]
    TB = _pick_batch_block(B, batch_tile)

    # Fold the mean normalizations into the first-layer weights (biases untouched):
    #   spatial_info = x.mean(2) = spatial_sum / d   ->  sw1 * (1/d)
    #   channel_info = x.mean(1) = channel_sum / n   ->  cw1 * (1/n)
    inv_n = jnp.float32(1.0 / n)
    inv_d = jnp.float32(1.0 / d)

    fw1_c = params["fw1"][:path, :]    # multiplies channel_weight (cat order: channel first)
    fw1_s = params["fw1"][path:, :]    # multiplies spatial_weight

    weights = [
        params["sw1"] * inv_d, params["sb1"].reshape(1, -1),
        params["sw2"], params["sb2"].reshape(1, -1),
        params["cw1"] * inv_n, params["cb1"].reshape(1, -1),
        params["cw2"], params["cb2"].reshape(1, -1),
        fw1_c, fw1_s, params["fb1"].reshape(1, -1),
        params["fw2"], params["fb2"].reshape(1, -1),
    ]

    def full_spec(a):
        # Whole (tiny) weight array resident in VMEM for every grid step.
        zeros = (0,) * a.ndim
        return pl.BlockSpec(a.shape, lambda i, _z=zeros: _z)

    # VMEM budget: two double-buffered x blocks, sized with the n -> round_up(n,8)
    # sublane pad and d -> round_up(d,128) lane pad, plus resident weights + margin.
    # Floor at 32 MiB (>= default scoped limit), cap well under any physical VMEM.
    x_block_bytes = TB * _round_up(n, 8) * _round_up(d, 128) * x.dtype.itemsize
    vmem_limit = int(min(max(2 * x_block_bytes + (12 << 20), 32 << 20), 100 << 20))

    out = pl.pallas_call(
        _router_kernel,
        out_shape=jax.ShapeDtypeStruct((B, path), jnp.float32),
        grid=(pl.cdiv(B, TB),),
        in_specs=[pl.BlockSpec((TB, n, d), lambda i: (i, 0, 0))]
                 + [full_spec(a) for a in weights],
        out_specs=pl.BlockSpec((TB, path), lambda i: (i, 0)),
        compiler_params=pltpu.CompilerParams(
            dimension_semantics=("parallel",),
            vmem_limit_bytes=vmem_limit),
    )(x, *weights)

    return out[:, :, None, None]             # (B, path, 1, 1) like unsqueeze(-1).unsqueeze(-1)


# ----------------------------------------------------------------------------
# Pure-JAX reference (for correctness check) and deterministic init
# ----------------------------------------------------------------------------

def router_reference(params, x):
    x = x.astype(jnp.float32)
    channel_info = jnp.mean(x, axis=1)
    spatial_info = jnp.mean(x, axis=2)
    s = jnp.maximum(spatial_info @ params["sw1"] + params["sb1"], 0.0)
    s = s @ params["sw2"] + params["sb2"]
    c = jnp.maximum(channel_info @ params["cw1"] + params["cb1"], 0.0)
    c = c @ params["cw2"] + params["cb2"]
    w = jnp.concatenate([c, s], axis=-1)
    w = jnp.maximum(w @ params["fw1"] + params["fb1"], 0.0)
    w = w @ params["fw2"] + params["fb2"]
    w = jax.nn.softmax(w, axis=-1)
    return w[:, :, None, None]


def init_router_params(key, n=49, dim=512, r1=7, r2=16, path=3):
    """torch nn.Linear-style init (uniform +-1/sqrt(fan_in), bias=True), weights stored (in, out)."""
    ks = jax.random.split(key, 12)

    def lin(kw, kb, fan_in, fan_out):
        bound = float(fan_in) ** -0.5
        w = jax.random.uniform(kw, (fan_in, fan_out), jnp.float32, -bound, bound)
        b = jax.random.uniform(kb, (fan_out,), jnp.float32, -bound, bound)
        return w, b

    sw1, sb1 = lin(ks[0], ks[1], n, n // r1)
    sw2, sb2 = lin(ks[2], ks[3], n // r1, path)
    cw1, cb1 = lin(ks[4], ks[5], dim, dim // r2)
    cw2, cb2 = lin(ks[6], ks[7], dim // r2, path)
    fw1, fb1 = lin(ks[8], ks[9], 2 * path, path)
    fw2, fb2 = lin(ks[10], ks[11], path, path)
    return dict(sw1=sw1, sb1=sb1, sw2=sw2, sb2=sb2,
                cw1=cw1, cb1=cb1, cw2=cw2, cb2=cb2,
                fw1=fw1, fb1=fb1, fw2=fw2, fb2=fb2)


# ----------------------------------------------------------------------------
# Main
# ----------------------------------------------------------------------------

if __name__ == "__main__":
    # Router defaults from the module: n=49 tokens (7x7 grid), dim=512, path=3.
    B, n, dim, path = 2, 49, 512, 3

    key = jax.random.PRNGKey(0)
    pkey, xkey, xkey2 = jax.random.split(key, 3)
    params = init_router_params(pkey, n=n, dim=dim, path=path)
    x = jax.random.normal(xkey, (B, n, dim), jnp.float32)

    # --- primary check: small batch, single grid step ---
    fwd = jax.jit(router_forward)
    out = jax.block_until_ready(fwd(params, x))
    ref = jax.block_until_ready(router_reference(params, x))

    assert out.shape == (B, path, 1, 1) and out.dtype == jnp.float32
    assert bool(jnp.all(jnp.isfinite(out)))
    # Router output is a softmax over paths: each batch row sums to 1.
    assert bool(jnp.allclose(jnp.sum(out, axis=1), 1.0, atol=1e-5))
    assert bool(jnp.allclose(out, ref, atol=1e-4, rtol=1e-4))

    # --- multi-step grid with a partial last block (B % TB != 0) ---
    # Exercises the masked writeback path flagged in the performance review.
    B2 = 10
    x2 = jax.random.normal(xkey2, (B2, n, dim), jnp.float32)
    fwd2 = jax.jit(functools.partial(router_forward, batch_tile=8))
    out2 = jax.block_until_ready(fwd2(params, x2))
    ref2 = router_reference(params, x2)
    assert out2.shape == (B2, path, 1, 1)
    assert bool(jnp.all(jnp.isfinite(out2)))
    assert bool(jnp.allclose(out2, ref2, atol=1e-4, rtol=1e-4))

    # --- bf16 streaming path (halves HBM bytes of the only large operand) ---
    xb = x2.astype(jnp.bfloat16)
    outb = jax.block_until_ready(fwd(params, xb))
    refb = router_reference(params, xb)
    assert outb.dtype == jnp.float32
    assert bool(jnp.allclose(outb, refb, atol=1e-4, rtol=1e-4))

    print("KERNEL_OK")
</pallas_src>

<mosaic_0001>
module attributes {stable_mosaic.version = 11 : i64} {
  func.func @_router_kernel(%arg0: i32, %arg1: memref<2x49x512xf32, #tpu.memory_space<vmem>>, %arg2: memref<49x7xf32, #tpu.memory_space<vmem>>, %arg3: memref<1x7xf32, #tpu.memory_space<vmem>>, %arg4: memref<7x3xf32, #tpu.memory_space<vmem>>, %arg5: memref<1x3xf32, #tpu.memory_space<vmem>>, %arg6: memref<512x32xf32, #tpu.memory_space<vmem>>, %arg7: memref<1x32xf32, #tpu.memory_space<vmem>>, %arg8: memref<32x3xf32, #tpu.memory_space<vmem>>, %arg9: memref<1x3xf32, #tpu.memory_space<vmem>>, %arg10: memref<3x3xf32, #tpu.memory_space<vmem>>, %arg11: memref<3x3xf32, #tpu.memory_space<vmem>>, %arg12: memref<1x3xf32, #tpu.memory_space<vmem>>, %arg13: memref<3x3xf32, #tpu.memory_space<vmem>>, %arg14: memref<1x3xf32, #tpu.memory_space<vmem>>, %arg15: memref<2x3xf32, #tpu.memory_space<vmem>>) attributes {dimension_semantics = [#tpu.dimension_semantics<parallel>], iteration_bounds = array<i64: 1>, scalar_prefetch = 0 : i64, scratch_operands = 0 : i64, tpu.core_type = #tpu.core_type<tc>, window_params = [{transform_indices = @transform_0, window_bounds = array<i64: 2, 49, 512>}, {pipeline_mode = #tpu.pipeline_mode<synchronous>, transform_indices = @transform_1, window_bounds = array<i64: 49, 7>}, {pipeline_mode = #tpu.pipeline_mode<synchronous>, transform_indices = @transform_2, window_bounds = array<i64: 1, 7>}, {pipeline_mode = #tpu.pipeline_mode<synchronous>, transform_indices = @transform_3, window_bounds = array<i64: 7, 3>}, {pipeline_mode = #tpu.pipeline_mode<synchronous>, transform_indices = @transform_4, window_bounds = array<i64: 1, 3>}, {pipeline_mode = #tpu.pipeline_mode<synchronous>, transform_indices = @transform_5, window_bounds = array<i64: 512, 32>}, {pipeline_mode = #tpu.pipeline_mode<synchronous>, transform_indices = @transform_6, window_bounds = array<i64: 1, 32>}, {pipeline_mode = #tpu.pipeline_mode<synchronous>, transform_indices = @transform_7, window_bounds = array<i64: 32, 3>}, {pipeline_mode = #tpu.pipeline_mode<synchronous>, transform_indices = @transform_8, window_bounds = array<i64: 1, 3>}, {pipeline_mode = #tpu.pipeline_mode<synchronous>, transform_indices = @transform_9, window_bounds = array<i64: 3, 3>}, {pipeline_mode = #tpu.pipeline_mode<synchronous>, transform_indices = @transform_10, window_bounds = array<i64: 3, 3>}, {pipeline_mode = #tpu.pipeline_mode<synchronous>, transform_indices = @transform_11, window_bounds = array<i64: 1, 3>}, {pipeline_mode = #tpu.pipeline_mode<synchronous>, transform_indices = @transform_12, window_bounds = array<i64: 3, 3>}, {pipeline_mode = #tpu.pipeline_mode<synchronous>, transform_indices = @transform_13, window_bounds = array<i64: 1, 3>}, {transform_indices = @transform_14, window_bounds = array<i64: 2, 3>}]} {
    %c0 = arith.constant 0 : index
    %c0_0 = arith.constant 0 : index
    %c0_1 = arith.constant 0 : index
    %0 = vector.load %arg1[%c0, %c0_0, %c0_1] : memref<2x49x512xf32, #tpu.memory_space<vmem>>, vector<2x49x512xf32>
    %cst = arith.constant dense<0.000000e+00> : vector<2x512xf32>
    %1 = vector.multi_reduction <add>, %0, %cst [1] : vector<2x49x512xf32> to vector<2x512xf32>
    %cst_2 = arith.constant dense<0.000000e+00> : vector<2x49xf32>
    %2 = vector.multi_reduction <add>, %0, %cst_2 [2] : vector<2x49x512xf32> to vector<2x49xf32>
    %c0_3 = arith.constant 0 : index
    %c0_4 = arith.constant 0 : index
    %3 = vector.load %arg2[%c0_3, %c0_4] : memref<49x7xf32, #tpu.memory_space<vmem>>, vector<49x7xf32>
    %cst_5 = arith.constant dense<0.000000e+00> : vector<2x7xf32>
    %4 = tpu.matmul %2, %3, %cst_5 {dimension_numbers = #tpu.dot_dimension_numbers<[1], [0], [0], [1], [0, 0, 1, 1], [], []>} : vector<2x49xf32>, vector<49x7xf32>, vector<2x7xf32> -> vector<2x7xf32>
    %c0_6 = arith.constant 0 : index
    %c0_7 = arith.constant 0 : index
    %5 = vector.load %arg3[%c0_6, %c0_7] : memref<1x7xf32, #tpu.memory_space<vmem>>, vector<1x7xf32>
    %6 = vector.broadcast %5 : vector<1x7xf32> to vector<2x7xf32>
    %7 = arith.addf %4, %6 : vector<2x7xf32>
    %cst_8 = arith.constant 0.000000e+00 : f32
    %8 = vector.broadcast %cst_8 : f32 to vector<2x7xf32>
    %9 = arith.maximumf %7, %8 : vector<2x7xf32>
    %c0_9 = arith.constant 0 : index
    %c0_10 = arith.constant 0 : index
    %10 = vector.load %arg4[%c0_9, %c0_10] : memref<7x3xf32, #tpu.memory_space<vmem>>, vector<7x3xf32>
    %cst_11 = arith.constant dense<0.000000e+00> : vector<2x3xf32>
    %11 = tpu.matmul %9, %10, %cst_11 {dimension_numbers = #tpu.dot_dimension_numbers<[1], [0], [0], [1], [0, 0, 1, 1], [], []>} : vector<2x7xf32>, vector<7x3xf32>, vector<2x3xf32> -> vector<2x3xf32>
    %c0_12 = arith.constant 0 : index
    %c0_13 = arith.constant 0 : index
    %12 = vector.load %arg5[%c0_12, %c0_13] : memref<1x3xf32, #tpu.memory_space<vmem>>, vector<1x3xf32>
    %13 = vector.broadcast %12 : vector<1x3xf32> to vector<2x3xf32>
    %14 = arith.addf %11, %13 : vector<2x3xf32>
    %c0_14 = arith.constant 0 : index
    %c0_15 = arith.constant 0 : index
    %15 = vector.load %arg6[%c0_14, %c0_15] : memref<512x32xf32, #tpu.memory_space<vmem>>, vector<512x32xf32>
    %cst_16 = arith.constant dense<0.000000e+00> : vector<2x32xf32>
    %16 = tpu.matmul %1, %15, %cst_16 {dimension_numbers = #tpu.dot_dimension_numbers<[1], [0], [0], [1], [0, 0, 1, 1], [], []>} : vector<2x512xf32>, vector<512x32xf32>, vector<2x32xf32> -> vector<2x32xf32>
    %c0_17 = arith.constant 0 : index
    %c0_18 = arith.constant 0 : index
    %17 = vector.load %arg7[%c0_17, %c0_18] : memref<1x32xf32, #tpu.memory_space<vmem>>, vector<1x32xf32>
    %18 = vector.broadcast %17 : vector<1x32xf32> to vector<2x32xf32>
    %19 = arith.addf %16, %18 : vector<2x32xf32>
    %cst_19 = arith.constant 0.000000e+00 : f32
    %20 = vector.broadcast %cst_19 : f32 to vector<2x32xf32>
    %21 = arith.maximumf %19, %20 : vector<2x32xf32>
    %c0_20 = arith.constant 0 : index
    %c0_21 = arith.constant 0 : index
    %22 = vector.load %arg8[%c0_20, %c0_21] : memref<32x3xf32, #tpu.memory_space<vmem>>, vector<32x3xf32>
    %cst_22 = arith.constant dense<0.000000e+00> : vector<2x3xf32>
    %23 = tpu.matmul %21, %22, %cst_22 {dimension_numbers = #tpu.dot_dimension_numbers<[1], [0], [0], [1], [0, 0, 1, 1], [], []>} : vector<2x32xf32>, vector<32x3xf32>, vector<2x3xf32> -> vector<2x3xf32>
    %c0_23 = arith.constant 0 : index
    %c0_24 = arith.constant 0 : index
    %24 = vector.load %arg9[%c0_23, %c0_24] : memref<1x3xf32, #tpu.memory_space<vmem>>, vector<1x3xf32>
    %25 = vector.broadcast %24 : vector<1x3xf32> to vector<2x3xf32>
    %26 = arith.addf %23, %25 : vector<2x3xf32>
    %c0_25 = arith.constant 0 : index
    %c0_26 = arith.constant 0 : index
    %27 = vector.load %arg10[%c0_25, %c0_26] : memref<3x3xf32, #tpu.memory_space<vmem>>, vector<3x3xf32>
    %cst_27 = arith.constant dense<0.000000e+00> : vector<2x3xf32>
    %28 = tpu.matmul %26, %27, %cst_27 {dimension_numbers = #tpu.dot_dimension_numbers<[1], [0], [0], [1], [0, 0, 1, 1], [], []>} : vector<2x3xf32>, vector<3x3xf32>, vector<2x3xf32> -> vector<2x3xf32>
    %c0_28 = arith.constant 0 : index
    %c0_29 = arith.constant 0 : index
    %29 = vector.load %arg11[%c0_28, %c0_29] : memref<3x3xf32, #tpu.memory_space<vmem>>, vector<3x3xf32>
    %cst_30 = arith.constant dense<0.000000e+00> : vector<2x3xf32>
    %30 = tpu.matmul %14, %29, %cst_30 {dimension_numbers = #tpu.dot_dimension_numbers<[1], [0], [0], [1], [0, 0, 1, 1], [], []>} : vector<2x3xf32>, vector<3x3xf32>, vector<2x3xf32> -> vector<2x3xf32>
    %31 = arith.addf %28, %30 : vector<2x3xf32>
    %c0_31 = arith.constant 0 : index
    %c0_32 = arith.constant 0 : index
    %32 = vector.load %arg12[%c0_31, %c0_32] : memref<1x3xf32, #tpu.memory_space<vmem>>, vector<1x3xf32>
    %33 = vector.broadcast %32 : vector<1x3xf32> to vector<2x3xf32>
    %34 = arith.addf %31, %33 : vector<2x3xf32>
    %cst_33 = arith.constant 0.000000e+00 : f32
    %35 = vector.broadcast %cst_33 : f32 to vector<2x3xf32>
    %36 = arith.maximumf %34, %35 : vector<2x3xf32>
    %c0_34 = arith.constant 0 : index
    %c0_35 = arith.constant 0 : index
    %37 = vector.load %arg13[%c0_34, %c0_35] : memref<3x3xf32, #tpu.memory_space<vmem>>, vector<3x3xf32>
    %cst_36 = arith.constant dense<0.000000e+00> : vector<2x3xf32>
    %38 = tpu.matmul %36, %37, %cst_36 {dimension_numbers = #tpu.dot_dimension_numbers<[1], [0], [0], [1], [0, 0, 1, 1], [], []>} : vector<2x3xf32>, vector<3x3xf32>, vector<2x3xf32> -> vector<2x3xf32>
    %c0_37 = arith.constant 0 : index
    %c0_38 = arith.constant 0 : index
    %39 = vector.load %arg14[%c0_37, %c0_38] : memref<1x3xf32, #tpu.memory_space<vmem>>, vector<1x3xf32>
    %40 = vector.broadcast %39 : vector<1x3xf32> to vector<2x3xf32>
    %41 = arith.addf %38, %40 : vector<2x3xf32>
    %cst_39 = arith.constant dense<0xFF800000> : vector<2xf32>
    %42 = vector.multi_reduction <maximumf>, %41, %cst_39 [1] : vector<2x3xf32> to vector<2xf32>
    %43 = vector.shape_cast %42 : vector<2xf32> to vector<2x1xf32>
    %44 = vector.broadcast %43 : vector<2x1xf32> to vector<2x3xf32>
    %45 = arith.subf %41, %44 : vector<2x3xf32>
    %46 = math.exp %45 : vector<2x3xf32>
    %cst_40 = arith.constant dense<0.000000e+00> : vector<2xf32>
    %47 = vector.multi_reduction <add>, %46, %cst_40 [1] : vector<2x3xf32> to vector<2xf32>
    %48 = vector.shape_cast %47 : vector<2xf32> to vector<2x1xf32>
    %49 = vector.broadcast %48 : vector<2x1xf32> to vector<2x3xf32>
    %50 = arith.divf %46, %49 : vector<2x3xf32>
    %c0_41 = arith.constant 0 : index
    %c0_42 = arith.constant 0 : index
    %51 = vector.load %arg15[%c0_41, %c0_42] : memref<2x3xf32, #tpu.memory_space<vmem>>, vector<2x3xf32>
    tpu.vector_store %arg15[%c0_41, %c0_42], %50 {strides = array<i32>} : memref<2x3xf32, #tpu.memory_space<vmem>>, vector<2x3xf32>,
    return
  }
  func.func @transform_0(%arg0: i32) -> (i32, i32, i32) {
    %c0_i32 = arith.constant 0 : i32
    %c0_i32_0 = arith.constant 0 : i32
    %c0_i32_1 = arith.constant 0 : i32
    return %arg0, %c0_i32, %c0_i32_0 : i32, i32, i32
  }
  func.func @transform_1(%arg0: i32) -> (i32, i32) {
    %c0_i32 = arith.constant 0 : i32
    %c0_i32_0 = arith.constant 0 : i32
    %c0_i32_1 = arith.constant 0 : i32
    return %c0_i32, %c0_i32_0 : i32, i32
  }
  func.func @transform_2(%arg0: i32) -> (i32, i32) {
    %c0_i32 = arith.constant 0 : i32
    %c0_i32_0 = arith.constant 0 : i32
    %c0_i32_1 = arith.constant 0 : i32
    return %c0_i32, %c0_i32_0 : i32, i32
  }
  func.func @transform_3(%arg0: i32) -> (i32, i32) {
    %c0_i32 = arith.constant 0 : i32
    %c0_i32_0 = arith.constant 0 : i32
    %c0_i32_1 = arith.constant 0 : i32
    return %c0_i32, %c0_i32_0 : i32, i32
  }
  func.func @transform_4(%arg0: i32) -> (i32, i32) {
    %c0_i32 = arith.constant 0 : i32
    %c0_i32_0 = arith.constant 0 : i32
    %c0_i32_1 = arith.constant 0 : i32
    return %c0_i32, %c0_i32_0 : i32, i32
  }
  func.func @transform_5(%arg0: i32) -> (i32, i32) {
    %c0_i32 = arith.constant 0 : i32
    %c0_i32_0 = arith.constant 0 : i32
    %c0_i32_1 = arith.constant 0 : i32
    return %c0_i32, %c0_i32_0 : i32, i32
  }
  func.func @transform_6(%arg0: i32) -> (i32, i32) {
    %c0_i32 = arith.constant 0 : i32
    %c0_i32_0 = arith.constant 0 : i32
    %c0_i32_1 = arith.constant 0 : i32
    return %c0_i32, %c0_i32_0 : i32, i32
  }
  func.func @transform_7(%arg0: i32) -> (i32, i32) {
    %c0_i32 = arith.constant 0 : i32
    %c0_i32_0 = arith.constant 0 : i32
    %c0_i32_1 = arith.constant 0 : i32
    return %c0_i32, %c0_i32_0 : i32, i32
  }
  func.func @transform_8(%arg0: i32) -> (i32, i32) {
    %c0_i32 = arith.constant 0 : i32
    %c0_i32_0 = arith.constant 0 : i32
    %c0_i32_1 = arith.constant 0 : i32
    return %c0_i32, %c0_i32_0 : i32, i32
  }
  func.func @transform_9(%arg0: i32) -> (i32, i32) {
    %c0_i32 = arith.constant 0 : i32
    %c0_i32_0 = arith.constant 0 : i32
    %c0_i32_1 = arith.constant 0 : i32
    return %c0_i32, %c0_i32_0 : i32, i32
  }
  func.func @transform_10(%arg0: i32) -> (i32, i32) {
    %c0_i32 = arith.constant 0 : i32
    %c0_i32_0 = arith.constant 0 : i32
    %c0_i32_1 = arith.constant 0 : i32
    return %c0_i32, %c0_i32_0 : i32, i32
  }
  func.func @transform_11(%arg0: i32) -> (i32, i32) {
    %c0_i32 = arith.constant 0 : i32
    %c0_i32_0 = arith.constant 0 : i32
    %c0_i32_1 = arith.constant 0 : i32
    return %c0_i32, %c0_i32_0 : i32, i32
  }
  func.func @transform_12(%arg0: i32) -> (i32, i32) {
    %c0_i32 = arith.constant 0 : i32
    %c0_i32_0 = arith.constant 0 : i32
    %c0_i32_1 = arith.constant 0 : i32
    return %c0_i32, %c0_i32_0 : i32, i32
  }
  func.func @transform_13(%arg0: i32) -> (i32, i32) {
    %c0_i32 = arith.constant 0 : i32
    %c0_i32_0 = arith.constant 0 : i32
    %c0_i32_1 = arith.constant 0 : i32
    return %c0_i32, %c0_i32_0 : i32, i32
  }
  func.func @transform_14(%arg0: i32) -> (i32, i32) {
    %c0_i32 = arith.constant 0 : i32
    %c0_i32_0 = arith.constant 0 : i32
    return %arg0, %c0_i32 : i32, i32
  }
}

</mosaic_0001>

<llo_original>
// kernel: router_forward.1
$region0: #{router_forward.1}
  #allocation0 [shape = 'u32[]', space=smem, size = 0x4, offset = 0x4, fixed_abs, tag = 'smem constant byte address 0x4 - core index']
  #allocation1 [shape = 'u32[144,128]{1,0:T(1,128)}', space=vmem, size = 0x12000, scoped, tag = 'internal scratch']
  %s0 = inlined_call_operand.vmem [shape: f32[2,49,512], index: 0, kind: input, shape index: {}]
  %s1 = inlined_call_operand.vmem [shape: f32[49,7], index: 1, kind: input, shape index: {}]
  %s2 = inlined_call_operand.vmem [shape: f32[1,7], index: 2, kind: input, shape index: {}]
  %s3 = inlined_call_operand.vmem [shape: f32[7,3], index: 3, kind: input, shape index: {}]
  %s4 = inlined_call_operand.vmem [shape: f32[1,3], index: 4, kind: input, shape index: {}]
  %s5 = inlined_call_operand.vmem [shape: f32[512,32], index: 5, kind: input, shape index: {}]
  %s6 = inlined_call_operand.vmem [shape: f32[1,32], index: 6, kind: input, shape index: {}]
  %s7 = inlined_call_operand.vmem [shape: f32[32,3], index: 7, kind: input, shape index: {}]
  %s8 = inlined_call_operand.vmem [shape: f32[1,3], index: 8, kind: input, shape index: {}]
  %s9 = inlined_call_operand.vmem [shape: f32[3,3], index: 9, kind: input, shape index: {}]
  %s10 = inlined_call_operand.vmem [shape: f32[3,3], index: 10, kind: input, shape index: {}]
  %s11 = inlined_call_operand.vmem [shape: f32[1,3], index: 11, kind: input, shape index: {}]
  %s12 = inlined_call_operand.vmem [shape: f32[3,3], index: 12, kind: input, shape index: {}]
  %s13 = inlined_call_operand.vmem [shape: f32[1,3], index: 13, kind: input, shape index: {}]
  %s14 = inlined_call_operand.hbm [shape: f32[2,3], index: 14, kind: output, shape index: {}]
  %s15 = sld [smem:[#allocation0]]
  $region66: #{router_forward.1} parent=0
    _
  %s17 = ssub.s32 1, %s15
  %s18 = scalar_select 0, %s17, %s15
  $region1: #{router_forward.1} parent=0
    #allocation2 [shape = 'u8[1024]{0}', space=vmem, size = 0x400, scoped, tag = 'output window, operand 0, single buffered']
    #allocation3 [shape = 's32[1]{0}', space=sflag, size = 0x4, scoped, tag = 'scoped memory for router_forward.1']
    %19 = vsyncpa [#allocation3], 0
    // Predicated region
    $region2: #{router_forward.1} parent=1 // pred_check
      _
    $region3: #{router_forward.1} parent=1 // pred_check_branch
      %21 = sbr.rel (0) target = $region5
    $region4: #{router_forward.1} parent=1 // pred_region
      _
    $region5: #{router_forward.1} parent=1 // pred_fallthru
      _
    // Predicated region
    $region6: #{router_forward.1} parent=1 // pred_check
      _
    $region7: #{router_forward.1} parent=1 // pred_check_branch
      %23 = sbr.rel (0) target = $region9
    $region8: #{router_forward.1} parent=1 // pred_region
      _
    $region9: #{router_forward.1} parent=1 // pred_fallthru
      _
    // Predicated region
    $region10: #{router_forward.1} parent=1 // pred_check
      _
    $region11: #{router_forward.1} parent=1 // pred_check_branch
      %25 = sbr.rel (0) target = $region13
    $region12: #{router_forward.1} parent=1 // pred_region
      _
    $region13: #{router_forward.1} parent=1 // pred_fallthru
      _
    // Predicated region
    $region14: #{router_forward.1} parent=1 // pred_check
      _
    $region15: #{router_forward.1} parent=1 // pred_check_branch
      %27 = sbr.rel (0) target = $region17
    $region16: #{router_forward.1} parent=1 // pred_region
      _
    $region17: #{router_forward.1} parent=1 // pred_fallthru
      _
    // Predicated region
    $region18: #{router_forward.1} parent=1 // pred_check
      _
    $region19: #{router_forward.1} parent=1 // pred_check_branch
      %29 = sbr.rel (0) target = $region21
    $region20: #{router_forward.1} parent=1 // pred_region
      _
    $region21: #{router_forward.1} parent=1 // pred_fallthru
      _
    // Predicated region
    $region22: #{router_forward.1} parent=1 // pred_check
      _
    $region23: #{router_forward.1} parent=1 // pred_check_branch
      %31 = sbr.rel (0) target = $region25
    $region24: #{router_forward.1} parent=1 // pred_region
      _
    $region25: #{router_forward.1} parent=1 // pred_fallthru
      _
    // Predicated region
    $region26: #{router_forward.1} parent=1 // pred_check
      _
    $region27: #{router_forward.1} parent=1 // pred_check_branch
      %33 = sbr.rel (0) target = $region29
    $region28: #{router_forward.1} parent=1 // pred_region
      _
    $region29: #{router_forward.1} parent=1 // pred_fallthru
      _
    // Predicated region
    $region30: #{router_forward.1} parent=1 // pred_check
      _
    $region31: #{router_forward.1} parent=1 // pred_check_branch
      %35 = sbr.rel (0) target = $region33
    $region32: #{router_forward.1} parent=1 // pred_region
      _
    $region33: #{router_forward.1} parent=1 // pred_fallthru
      _
    // Predicated region
    $region34: #{router_forward.1} parent=1 // pred_check
      _
    $region35: #{router_forward.1} parent=1 // pred_check_branch
      %37 = sbr.rel (0) target = $region37
    $region36: #{router_forward.1} parent=1 // pred_region
      _
    $region37: #{router_forward.1} parent=1 // pred_fallthru
      _
    // Predicated region
    $region38: #{router_forward.1} parent=1 // pred_check
      _
    $region39: #{router_forward.1} parent=1 // pred_check_branch
      %39 = sbr.rel (0) target = $region41
    $region40: #{router_forward.1} parent=1 // pred_region
      _
    $region41: #{router_forward.1} parent=1 // pred_fallthru
      _
    // Predicated region
    $region42: #{router_forward.1} parent=1 // pred_check
      _
    $region43: #{router_forward.1} parent=1 // pred_check_branch
      %41 = sbr.rel (0) target = $region45
    $region44: #{router_forward.1} parent=1 // pred_region
      _
    $region45: #{router_forward.1} parent=1 // pred_fallthru
      _
    // Predicated region
    $region46: #{router_forward.1} parent=1 // pred_check
      _
    $region47: #{router_forward.1} parent=1 // pred_check_branch
      %43 = sbr.rel (0) target = $region49
    $region48: #{router_forward.1} parent=1 // pred_region
      _
    $region49: #{router_forward.1} parent=1 // pred_fallthru
      _
    // Predicated region
    $region50: #{router_forward.1} parent=1 // pred_check
      _
    $region51: #{router_forward.1} parent=1 // pred_check_branch
      %45 = sbr.rel (0) target = $region53
    $region52: #{router_forward.1} parent=1 // pred_region
      _
    $region53: #{router_forward.1} parent=1 // pred_fallthru
      _
    // Predicated region
    $region54: #{router_forward.1} parent=1 // pred_check
      _
    $region55: #{router_forward.1} parent=1 // pred_check_branch
      %47 = sbr.rel (0) target = $region57
    $region56: #{router_forward.1} parent=1 // pred_region
      _
    $region57: #{router_forward.1} parent=1 // pred_fallthru
      _
    %v48 = vld [vmem:[%s0] sm:$0xff]
    %v49 = vld [vmem:[%s0 + $0x8] sm:$0xff]
    %v50 = vld [vmem:[%s0 + $0x10] sm:$0xff]
    %v51 = vld [vmem:[%s0 + $0x18] sm:$0xff]
    %v52 = vld [vmem:[%s0 + $0x20] sm:$0xff]
    %v53 = vld [vmem:[%s0 + $0x28] sm:$0xff]
    %v54 = vld [vmem:[%s0 + $0x30] sm:$0xff]
    %v55 = vld [vmem:[%s0 + $0x38] sm:$0xff]
    %v56 = vld [vmem:[%s0 + $0x40] sm:$0xff]
    %v57 = vld [vmem:[%s0 + $0x48] sm:$0xff]
    %v58 = vld [vmem:[%s0 + $0x50] sm:$0xff]
    %v59 = vld [vmem:[%s0 + $0x58] sm:$0xff]
    %v60 = vld [vmem:[%s0 + $0x60] sm:$0xff]
    %v61 = vld [vmem:[%s0 + $0x68] sm:$0xff]
    %v62 = vld [vmem:[%s0 + $0x70] sm:$0xff]
    %v63 = vld [vmem:[%s0 + $0x78] sm:$0xff]
    %v64 = vld [vmem:[%s0 + $0x80] sm:$0xff]
    %v65 = vld [vmem:[%s0 + $0x88] sm:$0xff]
    %v66 = vld [vmem:[%s0 + $0x90] sm:$0xff]
    %v67 = vld [vmem:[%s0 + $0x98] sm:$0xff]
    %v68 = vld [vmem:[%s0 + $0xa0] sm:$0xff]
    %v69 = vld [vmem:[%s0 + $0xa8] sm:$0xff]
    %v70 = vld [vmem:[%s0 + $0xb0] sm:$0xff]
    %v71 = vld [vmem:[%s0 + $0xb8] sm:$0xff]
    %v72 = vld [vmem:[%s0 + $0xc0] sm:$0x1]
    %v73 = vld [vmem:[%s0 + $0xc8] sm:$0x1]
    %v74 = vld [vmem:[%s0 + $0xd0] sm:$0x1]
    %v75 = vld [vmem:[%s0 + $0xd8] sm:$0x1]
    %v76 = vld [vmem:[%s0 + $0xe0] sm:$0xff]
    %v77 = vld [vmem:[%s0 + $0xe8] sm:$0xff]
    %v78 = vld [vmem:[%s0 + $0xf0] sm:$0xff]
    %v79 = vld [vmem:[%s0 + $0xf8] sm:$0xff]
    %v80 = vld [vmem:[%s0 + $0x100] sm:$0xff]
    %v81 = vld [vmem:[%s0 + $0x108] sm:$0xff]
    %v82 = vld [vmem:[%s0 + $0x110] sm:$0xff]
    %v83 = vld [vmem:[%s0 + $0x118] sm:$0xff]
    %v84 = vld [vmem:[%s0 + $0x120] sm:$0xff]
    %v85 = vld [vmem:[%s0 + $0x128] sm:$0xff]
    %v86 = vld [vmem:[%s0 + $0x130] sm:$0xff]
    %v87 = vld [vmem:[%s0 + $0x138] sm:$0xff]
    %v88 = vld [vmem:[%s0 + $0x140] sm:$0xff]
    %v89 = vld [vmem:[%s0 + $0x148] sm:$0xff]
    %v90 = vld [vmem:[%s0 + $0x150] sm:$0xff]
    %v91 = vld [vmem:[%s0 + $0x158] sm:$0xff]
    %v92 = vld [vmem:[%s0 + $0x160] sm:$0xff]
    %v93 = vld [vmem:[%s0 + $0x168] sm:$0xff]
    %v94 = vld [vmem:[%s0 + $0x170] sm:$0xff]
    %v95 = vld [vmem:[%s0 + $0x178] sm:$0xff]
    %v96 = vld [vmem:[%s0 + $0x180] sm:$0xff]
    %v97 = vld [vmem:[%s0 + $0x188] sm:$0xff]
    %v98 = vld [vmem:[%s0 + $0x190] sm:$0xff]
    %v99 = vld [vmem:[%s0 + $0x198] sm:$0xff]
    %v100 = vld [vmem:[%s0 + $0x1a0] sm:$0x1]
    %v101 = vld [vmem:[%s0 + $0x1a8] sm:$0x1]
    %v102 = vld [vmem:[%s0 + $0x1b0] sm:$0x1]
    %v103 = vld [vmem:[%s0 + $0x1b8] sm:$0x1]
    %v104 = vadd.f32 %v48, %v52
    %v105 = vadd.f32 %v104, %v56
    %v106 = vadd.f32 %v105, %v60
    %v107 = vadd.f32 %v106, %v64
    %v108 = vadd.f32 %v107, %v68
    %vm109 = vcmask 1040384
    %v110 = vsel %vm109, %v72, 0.0
    %v111 = vadd.f32 %v108, %v110
    %v112 = vrot.slane %v111, 4
    %v113 = vadd.f32 %v111, %v112
    %v114 = vrot.slane %v113, 2
    %v115 = vadd.f32 %v113, %v114
    %v116 = vrot.slane %v115, 1
    %v117 = vadd.f32 %v115, %v116
    %v118 = vadd.f32 %v49, %v53
    %v119 = vadd.f32 %v118, %v57
    %v120 = vadd.f32 %v119, %v61
    %v121 = vadd.f32 %v120, %v65
    %v122 = vadd.f32 %v121, %v69
    %v123 = vsel %vm109, %v73, 0.0
    %v124 = vadd.f32 %v122, %v123
    %v125 = vrot.slane %v124, 4
    %v126 = vadd.f32 %v124, %v125
    %v127 = vrot.slane %v126, 2
    %v128 = vadd.f32 %v126, %v127
    %v129 = vrot.slane %v128, 1
    %v130 = vadd.f32 %v128, %v129
    %v131 = vadd.f32 %v50, %v54
    %v132 = vadd.f32 %v131, %v58
    %v133 = vadd.f32 %v132, %v62
    %v134 = vadd.f32 %v133, %v66
    %v135 = vadd.f32 %v134, %v70
    %v136 = vsel %vm109, %v74, 0.0
    %v137 = vadd.f32 %v135, %v136
    %v138 = vrot.slane %v137, 4
    %v139 = vadd.f32 %v137, %v138
    %v140 = vrot.slane %v139, 2
    %v141 = vadd.f32 %v139, %v140
    %v142 = vrot.slane %v141, 1
    %v143 = vadd.f32 %v141, %v142
    %v144 = vadd.f32 %v51, %v55
    %v145 = vadd.f32 %v144, %v59
    %v146 = vadd.f32 %v145, %v63
    %v147 = vadd.f32 %v146, %v67
    %v148 = vadd.f32 %v147, %v71
    %v149 = vsel %vm109, %v75, 0.0
    %v150 = vadd.f32 %v148, %v149
    %v151 = vrot.slane %v150, 4
    %v152 = vadd.f32 %v150, %v151
    %v153 = vrot.slane %v152, 2
    %v154 = vadd.f32 %v152, %v153
    %v155 = vrot.slane %v154, 1
    %v156 = vadd.f32 %v154, %v155
    %v157 = vadd.f32 %v76, %v80
    %v158 = vadd.f32 %v157, %v84
    %v159 = vadd.f32 %v158, %v88
    %v160 = vadd.f32 %v159, %v92
    %v161 = vadd.f32 %v160, %v96
    %v162 = vsel %vm109, %v100, 0.0
    %v163 = vadd.f32 %v161, %v162
    %v164 = vrot.slane %v163, 4
    %v165 = vadd.f32 %v163, %v164
    %v166 = vrot.slane %v165, 2
    %v167 = vadd.f32 %v165, %v166
    %v168 = vrot.slane %v167, 1
    %v169 = vadd.f32 %v167, %v168
    %v170 = vadd.f32 %v77, %v81
    %v171 = vadd.f32 %v170, %v85
    %v172 = vadd.f32 %v171, %v89
    %v173 = vadd.f32 %v172, %v93
    %v174 = vadd.f32 %v173, %v97
    %v175 = vsel %vm109, %v101, 0.0
    %v176 = vadd.f32 %v174, %v175
    %v177 = vrot.slane %v176, 4
    %v178 = vadd.f32 %v176, %v177
    %v179 = vrot.slane %v178, 2
    %v180 = vadd.f32 %v178, %v179
    %v181 = vrot.slane %v180, 1
    %v182 = vadd.f32 %v180, %v181
    %v183 = vadd.f32 %v78, %v82
    %v184 = vadd.f32 %v183, %v86
    %v185 = vadd.f32 %v184, %v90
    %v186 = vadd.f32 %v185, %v94
    %v187 = vadd.f32 %v186, %v98
    %v188 = vsel %vm109, %v102, 0.0
    %v189 = vadd.f32 %v187, %v188
    %v190 = vrot.slane %v189, 4
    %v191 = vadd.f32 %v189, %v190
    %v192 = vrot.slane %v191, 2
    %v193 = vadd.f32 %v191, %v192
    %v194 = vrot.slane %v193, 1
    %v195 = vadd.f32 %v193, %v194
    %v196 = vadd.f32 %v79, %v83
    %v197 = vadd.f32 %v196, %v87
    %v198 = vadd.f32 %v197, %v91
    %v199 = vadd.f32 %v198, %v95
    %v200 = vadd.f32 %v199, %v99
    %v201 = vsel %vm109, %v103, 0.0
    %v202 = vadd.f32 %v200, %v201
    %v203 = vrot.slane %v202, 4
    %v204 = vadd.f32 %v202, %v203
    %v205 = vrot.slane %v204, 2
    %v206 = vadd.f32 %v204, %v205
    %v207 = vrot.slane %v206, 1
    %v208 = vadd.f32 %v206, %v207
    %v209 = vadd.f32 %v48, %v49
    %v210 = vadd.f32 %v209, %v50
    %v211 = vadd.f32 %v210, %v51
    %212 = vadd.xlane.f32.xlu0 %v211
    %v213 = vpop.xlane.xlu0 %212
    %v214 = vadd.f32 %v52, %v53
    %v215 = vadd.f32 %v214, %v54
    %v216 = vadd.f32 %v215, %v55
    %217 = vadd.xlane.f32.xlu0 %v216
    %v218 = vpop.xlane.xlu0 %217
    %v219 = vadd.f32 %v56, %v57
    %v220 = vadd.f32 %v219, %v58
    %v221 = vadd.f32 %v220, %v59
    %222 = vadd.xlane.f32.xlu0 %v221
    %v223 = vpop.xlane.xlu0 %222
    %v224 = vadd.f32 %v60, %v61
    %v225 = vadd.f32 %v224, %v62
    %v226 = vadd.f32 %v225, %v63
    %227 = vadd.xlane.f32.xlu0 %v226
    %v228 = vpop.xlane.xlu0 %227
    %v229 = vadd.f32 %v64, %v65
    %v230 = vadd.f32 %v229, %v66
    %v231 = vadd.f32 %v230, %v67
    %232 = vadd.xlane.f32.xlu0 %v231
    %v233 = vpop.xlane.xlu0 %232
    %v234 = vadd.f32 %v68, %v69
    %v235 = vadd.f32 %v234, %v70
    %v236 = vadd.f32 %v235, %v71
    %237 = vadd.xlane.f32.xlu0 %v236
    %v238 = vpop.xlane.xlu0 %237
    %v239 = vadd.f32 %v110, %v123
    %v240 = vadd.f32 %v239, %v136
    %v241 = vadd.f32 %v240, %v149
    %242 = vadd.xlane.f32.xlu0 %v241
    %v243 = vpop.xlane.xlu0 %242
    %v244 = vadd.f32 %v76, %v77
    %v245 = vadd.f32 %v244, %v78
    %v246 = vadd.f32 %v245, %v79
    %247 = vadd.xlane.f32.xlu0 %v246
    %v248 = vpop.xlane.xlu0 %247
    %v249 = vadd.f32 %v80, %v81
    %v250 = vadd.f32 %v249, %v82
    %v251 = vadd.f32 %v250, %v83
    %252 = vadd.xlane.f32.xlu0 %v251
    %v253 = vpop.xlane.xlu0 %252
    %v254 = vadd.f32 %v84, %v85
    %v255 = vadd.f32 %v254, %v86
    %v256 = vadd.f32 %v255, %v87
    %257 = vadd.xlane.f32.xlu0 %v256
    %v258 = vpop.xlane.xlu0 %257
    %v259 = vadd.f32 %v88, %v89
    %v260 = vadd.f32 %v259, %v90
    %v261 = vadd.f32 %v260, %v91
    %262 = vadd.xlane.f32.xlu0 %v261
    %v263 = vpop.xlane.xlu0 %262
    %v264 = vadd.f32 %v92, %v93
    %v265 = vadd.f32 %v264, %v94
    %v266 = vadd.f32 %v265, %v95
    %267 = vadd.xlane.f32.xlu0 %v266
    %v268 = vpop.xlane.xlu0 %267
    %v269 = vadd.f32 %v96, %v97
    %v270 = vadd.f32 %v269, %v98
    %v271 = vadd.f32 %v270, %v99
    %272 = vadd.xlane.f32.xlu0 %v271
    %v273 = vpop.xlane.xlu0 %272
    %v274 = vadd.f32 %v162, %v175
    %v275 = vadd.f32 %v274, %v188
    %v276 = vadd.f32 %v275, %v201
    %277 = vadd.xlane.f32.xlu0 %v276
    %v278 = vpop.xlane.xlu0 %277
    %v279 = vld [vmem:[%s1] sm:$0xff]
    %v280 = vld [vmem:[%s1 + $0x8] sm:$0xff]
    %v281 = vld [vmem:[%s1 + $0x10] sm:$0xff]
    %v282 = vld [vmem:[%s1 + $0x18] sm:$0xff]
    %v283 = vld [vmem:[%s1 + $0x20] sm:$0xff]
    %v284 = vld [vmem:[%s1 + $0x28] sm:$0xff]
    %v285 = vld [vmem:[%s1 + $0x30] sm:$0x1]
    %v286 = vld [vmem:[%s2] sm:$0x1]
    %v288 = vlaneseq
    %v289 = vshrl.u32 %v288, 7
    %v290 = vsub.s32 0, %v289
    %v291 = vrot.slane %v286, %v290
    %v307 = vlaneseq
    %v308 = vand.u32 %v307, 127
    %v309 = vlaneseq
    %v310 = vshrl.u32 %v309, 7
    %v311 = vsub.s32 %v308, %v310
    %v312 = vrot.slane %v213, %v311
    %v313 = vadd.s32 %v308, 4294967288
    %v314 = vlaneseq
    %v315 = vshrl.u32 %v314, 7
    %v316 = vsub.s32 %v313, %v315
    %v317 = vrot.slane %v218, %v316
    %vm318 = vcmask 130112
    %v319 = vsel %vm318, %v317, %v312
    %v320 = vadd.s32 %v308, 4294967280
    %v321 = vlaneseq
    %v322 = vshrl.u32 %v321, 7
    %v323 = vsub.s32 %v320, %v322
    %v324 = vrot.slane %v223, %v323
    %vm325 = vcmask 195712
    %v326 = vsel %vm325, %v324, %v319
    %v327 = vadd.s32 %v308, 4294967272
    %v328 = vlaneseq
    %v329 = vshrl.u32 %v328, 7
    %v330 = vsub.s32 %v327, %v329
    %v331 = vrot.slane %v228, %v330
    %vm332 = vcmask 261312
    %v333 = vsel %vm332, %v331, %v326
    %v334 = vadd.s32 %v308, 4294967264
    %v335 = vlaneseq
    %v336 = vshrl.u32 %v335, 7
    %v337 = vsub.s32 %v334, %v336
    %v338 = vrot.slane %v233, %v337
    %vm339 = vcmask 326912
    %v340 = vsel %vm339, %v338, %v333
    %v341 = vadd.s32 %v308, 4294967256
    %v342 = vlaneseq
    %v343 = vshrl.u32 %v342, 7
    %v344 = vsub.s32 %v341, %v343
    %v345 = vrot.slane %v238, %v344
    %vm346 = vcmask 392512
    %v347 = vsel %vm346, %v345, %v340
    %v348 = vadd.s32 %v308, 4294967248
    %v349 = vlaneseq
    %v350 = vshrl.u32 %v349, 7
    %v351 = vsub.s32 %v348, %v350
    %v352 = vrot.slane %v243, %v351
    %vm353 = vcmask 458112
    %v354 = vsel %vm353, %v352, %v347
    %v355 = vlaneseq
    %v356 = vshrl.u32 %v355, 7
    %v357 = vsub.s32 %v308, %v356
    %v358 = vrot.slane %v248, %v357
    %v359 = vlaneseq
    %v360 = vshrl.u32 %v359, 7
    %v361 = vsub.s32 %v313, %v360
    %v362 = vrot.slane %v253, %v361
    %v363 = vsel %vm318, %v362, %v358
    %v364 = vlaneseq
    %v365 = vshrl.u32 %v364, 7
    %v366 = vsub.s32 %v320, %v365
    %v367 = vrot.slane %v258, %v366
    %v368 = vsel %vm325, %v367, %v363
    %v369 = vlaneseq
    %v370 = vshrl.u32 %v369, 7
    %v371 = vsub.s32 %v327, %v370
    %v372 = vrot.slane %v263, %v371
    %v373 = vsel %vm332, %v372, %v368
    %v374 = vlaneseq
    %v375 = vshrl.u32 %v374, 7
    %v376 = vsub.s32 %v334, %v375
    %v377 = vrot.slane %v268, %v376
    %v378 = vsel %vm339, %v377, %v373
    %v379 = vlaneseq
    %v380 = vshrl.u32 %v379, 7
    %v381 = vsub.s32 %v341, %v380
    %v382 = vrot.slane %v273, %v381
    %v383 = vsel %vm346, %v382, %v378
    %v384 = vlaneseq
    %v385 = vshrl.u32 %v384, 7
    %v386 = vsub.s32 %v348, %v385
    %v387 = vrot.slane %v278, %v386
    %v388 = vsel %vm353, %v387, %v383
    %vm389 = vcmask 1041409
    %v390 = vsel %vm389, %v388, %v354
    %vm391 = vcmask 400384
    %v392 = vsel %vm391, %v390, 0
    %v395 = vsel %vm109, %v285, 0
    %397 = vmatprep.subr.mxu0 0.0
    %398 = vmatpush1.msra.mxu0 %v279
    %399 = vmatprep.subr.mxu0 0.0
    %400 = vmatpush1.msra.mxu0 %v280
    %401 = vmatprep.subr.mxu0 0.0
    %402 = vmatpush1.msra.mxu0 %v281
    %403 = vmatprep.subr.mxu0 0.0
    %404 = vmatpush1.msra.mxu0 %v282
    %405 = vmatprep.subr.mxu0 0.0
    %406 = vmatpush1.msra.mxu0 %v283
    %407 = vmatprep.subr.mxu0 0.0
    %408 = vmatpush1.msra.mxu0 %v284
    %409 = vmatprep.subr.mxu0 0.0
    %410 = vmatpush1.msra.mxu0 %v395
    %411 = vmatprep.subr.mxu0 0.0
    %412 = vmatpush1.msra.mxu0 0.0
    %413 = vmatprep.subr.mxu0 0.0
    %414 = vmatpush1.msra.mxu0 0.0
    %415 = vmatprep.subr.mxu0 0.0
    %416 = vmatpush1.msra.mxu0 0.0
    %417 = vmatprep.subr.mxu0 0.0
    %418 = vmatpush1.msra.mxu0 0.0
    %419 = vmatprep.subr.mxu0 0.0
    %420 = vmatpush1.msra.mxu0 0.0
    %421 = vmatprep.subr.mxu0 0.0
    %422 = vmatpush1.msra.mxu0 0.0
    %423 = vmatprep.subr.mxu0 0.0
    %424 = vmatpush1.msra.mxu0 0.0
    %425 = vmatprep.subr.mxu0 0.0
    %426 = vmatpush1.msra.mxu0 0.0
    %427 = vmatprep.subr.mxu0 0.0
    %428 = vmatpush1.msra.mxu0 0.0
    %429 = vmatprep.subr.mxu0 0.0
    %430 = vmatpush1.msra.mxu0 0.0
    %431 = vmatprep.subr.mxu0 0.0
    %432 = vmatpush1.msra.mxu0 0.0
    %433 = vmatprep.subr.mxu0 0.0
    %434 = vmatpush1.msra.mxu0 0.0
    %435 = vmatprep.subr.mxu0 0.0
    %436 = vmatpush1.msra.mxu0 0.0
    %437 = vmatprep.subr.mxu0 0.0
    %438 = vmatpush1.msra.mxu0 0.0
    %439 = vmatprep.subr.mxu0 0.0
    %440 = vmatpush1.msra.mxu0 0.0
    %441 = vmatprep.subr.mxu0 0.0
    %442 = vmatpush1.msra.mxu0 0.0
    %443 = vmatprep.subr.mxu0 0.0
    %444 = vmatpush1.msra.mxu0 0.0
    %445 = vmatprep.subr.mxu0 0.0
    %446 = vmatpush1.msra.mxu0 0.0
    %447 = vmatprep.subr.mxu0 0.0
    %448 = vmatpush1.msra.mxu0 0.0
    %449 = vmatprep.subr.mxu0 0.0
    %450 = vmatpush1.msra.mxu0 0.0
    %451 = vmatprep.subr.mxu0 0.0
    %452 = vmatpush1.msra.mxu0 0.0
    %453 = vmatprep.subr.mxu0 0.0
    %454 = vmatpush1.msra.mxu0 0.0
    %455 = vmatprep.subr.mxu0 0.0
    %456 = vmatpush1.msra.mxu0 0.0
    %457 = vmatprep.subr.mxu0 0.0
    %458 = vmatpush1.msra.mxu0 0.0
    %459 = vmatprep.subr.mxu0 0.0
    %460 = vmatpush1.msra.mxu0 0.0
    %461 = vmatprep.mubr.f32.mxu0 0.0
    %462 = vmatmul.mubr.f32.gmra.mrb[0].mxu0 %v392
    %v463 = vpop.f32.mrb[0].mxu0
    %v464 = vadd.f32 %v291, %v463
    %v465 = vpop.f32.mrb[0].mxu0
    %466 = vdwg.mxu0
    %v467 = vmax.f32 %v464, 0.0
    %v468 = vld [vmem:[%s3] sm:$0x7f]
    %v469 = vld [vmem:[%s4] sm:$0x1]
    %v471 = vlaneseq
    %v472 = vshrl.u32 %v471, 7
    %v473 = vsub.s32 0, %v472
    %v474 = vrot.slane %v469, %v473
    %vm476 = vcmask 56320
    %v478 = vsel %vm476, %v467, 0
    %vm480 = vcmask 1046528
    %v482 = vsel %vm480, %v468, 0
    %484 = vmatprep.subr.mxu0 0.0
    %485 = vmatpush1.msra.mxu0 %v482
    %486 = vmatprep.subr.mxu0 0.0
    %487 = vmatpush1.msra.mxu0 0.0
    %488 = vmatprep.subr.mxu0 0.0
    %489 = vmatpush1.msra.mxu0 0.0
    %490 = vmatprep.subr.mxu0 0.0
    %491 = vmatpush1.msra.mxu0 0.0
    %492 = vmatprep.subr.mxu0 0.0
    %493 = vmatpush1.msra.mxu0 0.0
    %494 = vmatprep.subr.mxu0 0.0
    %495 = vmatpush1.msra.mxu0 0.0
    %496 = vmatprep.subr.mxu0 0.0
    %497 = vmatpush1.msra.mxu0 0.0
    %498 = vmatprep.subr.mxu0 0.0
    %499 = vmatpush1.msra.mxu0 0.0
    %500 = vmatprep.subr.mxu0 0.0
    %501 = vmatpush1.msra.mxu0 0.0
    %502 = vmatprep.subr.mxu0 0.0
    %503 = vmatpush1.msra.mxu0 0.0
    %504 = vmatprep.subr.mxu0 0.0
    %505 = vmatpush1.msra.mxu0 0.0
    %506 = vmatprep.subr.mxu0 0.0
    %507 = vmatpush1.msra.mxu0 0.0
    %508 = vmatprep.subr.mxu0 0.0
    %509 = vmatpush1.msra.mxu0 0.0
    %510 = vmatprep.subr.mxu0 0.0
    %511 = vmatpush1.msra.mxu0 0.0
    %512 = vmatprep.subr.mxu0 0.0
    %513 = vmatpush1.msra.mxu0 0.0
    %514 = vmatprep.subr.mxu0 0.0
    %515 = vmatpush1.msra.mxu0 0.0
    %516 = vmatprep.subr.mxu0 0.0
    %517 = vmatpush1.msra.mxu0 0.0
    %518 = vmatprep.subr.mxu0 0.0
    %519 = vmatpush1.msra.mxu0 0.0
    %520 = vmatprep.subr.mxu0 0.0
    %521 = vmatpush1.msra.mxu0 0.0
    %522 = vmatprep.subr.mxu0 0.0
    %523 = vmatpush1.msra.mxu0 0.0
    %524 = vmatprep.subr.mxu0 0.0
    %525 = vmatpush1.msra.mxu0 0.0
    %526 = vmatprep.subr.mxu0 0.0
    %527 = vmatpush1.msra.mxu0 0.0
    %528 = vmatprep.subr.mxu0 0.0
    %529 = vmatpush1.msra.mxu0 0.0
    %530 = vmatprep.subr.mxu0 0.0
    %531 = vmatpush1.msra.mxu0 0.0
    %532 = vmatprep.subr.mxu0 0.0
    %533 = vmatpush1.msra.mxu0 0.0
    %534 = vmatprep.subr.mxu0 0.0
    %535 = vmatpush1.msra.mxu0 0.0
    %536 = vmatprep.subr.mxu0 0.0
    %537 = vmatpush1.msra.mxu0 0.0
    %538 = vmatprep.subr.mxu0 0.0
    %539 = vmatpush1.msra.mxu0 0.0
    %540 = vmatprep.subr.mxu0 0.0
    %541 = vmatpush1.msra.mxu0 0.0
    %542 = vmatprep.subr.mxu0 0.0
    %543 = vmatpush1.msra.mxu0 0.0
    %544 = vmatprep.subr.mxu0 0.0
    %545 = vmatpush1.msra.mxu0 0.0
    %546 = vmatprep.subr.mxu0 0.0
    %547 = vmatpush1.msra.mxu0 0.0
    %548 = vmatprep.mubr.f32.mxu0 0.0
    %549 = vmatmul.mubr.f32.gmra.mrb[0].mxu0 %v478
    %v550 = vpop.f32.mrb[0].mxu0
    %v551 = vadd.f32 %v474, %v550
    %v552 = vpop.f32.mrb[0].mxu0
    %553 = vdwg.mxu0
    %v554 = vld [vmem:[%s5] sm:$0xff]
    %v555 = vld [vmem:[%s5 + $0x8] sm:$0xff]
    %v556 = vld [vmem:[%s5 + $0x10] sm:$0xff]
    %v557 = vld [vmem:[%s5 + $0x18] sm:$0xff]
    %v558 = vld [vmem:[%s5 + $0x20] sm:$0xff]
    %v559 = vld [vmem:[%s5 + $0x28] sm:$0xff]
    %v560 = vld [vmem:[%s5 + $0x30] sm:$0xff]
    %v561 = vld [vmem:[%s5 + $0x38] sm:$0xff]
    %v562 = vld [vmem:[%s5 + $0x40] sm:$0xff]
    %v563 = vld [vmem:[%s5 + $0x48] sm:$0xff]
    %v564 = vld [vmem:[%s5 + $0x50] sm:$0xff]
    %v565 = vld [vmem:[%s5 + $0x58] sm:$0xff]
    %v566 = vld [vmem:[%s5 + $0x60] sm:$0xff]
    %v567 = vld [vmem:[%s5 + $0x68] sm:$0xff]
    %v568 = vld [vmem:[%s5 + $0x70] sm:$0xff]
    %v569 = vld [vmem:[%s5 + $0x78] sm:$0xff]
    %v570 = vld [vmem:[%s5 + $0x80] sm:$0xff]
    %v571 = vld [vmem:[%s5 + $0x88] sm:$0xff]
    %v572 = vld [vmem:[%s5 + $0x90] sm:$0xff]
    %v573 = vld [vmem:[%s5 + $0x98] sm:$0xff]
    %v574 = vld [vmem:[%s5 + $0xa0] sm:$0xff]
    %v575 = vld [vmem:[%s5 + $0xa8] sm:$0xff]
    %v576 = vld [vmem:[%s5 + $0xb0] sm:$0xff]
    %v577 = vld [vmem:[%s5 + $0xb8] sm:$0xff]
    %v578 = vld [vmem:[%s5 + $0xc0] sm:$0xff]
    %v579 = vld [vmem:[%s5 + $0xc8] sm:$0xff]
    %v580 = vld [vmem:[%s5 + $0xd0] sm:$0xff]
    %v581 = vld [vmem:[%s5 + $0xd8] sm:$0xff]
    %v582 = vld [vmem:[%s5 + $0xe0] sm:$0xff]
    %v583 = vld [vmem:[%s5 + $0xe8] sm:$0xff]
    %v584 = vld [vmem:[%s5 + $0xf0] sm:$0xff]
    %v585 = vld [vmem:[%s5 + $0xf8] sm:$0xff]
    %v586 = vld [vmem:[%s5 + $0x100] sm:$0xff]
    %v587 = vld [vmem:[%s5 + $0x108] sm:$0xff]
    %v588 = vld [vmem:[%s5 + $0x110] sm:$0xff]
    %v589 = vld [vmem:[%s5 + $0x118] sm:$0xff]
    %v590 = vld [vmem:[%s5 + $0x120] sm:$0xff]
    %v591 = vld [vmem:[%s5 + $0x128] sm:$0xff]
    %v592 = vld [vmem:[%s5 + $0x130] sm:$0xff]
    %v593 = vld [vmem:[%s5 + $0x138] sm:$0xff]
    %v594 = vld [vmem:[%s5 + $0x140] sm:$0xff]
    %v595 = vld [vmem:[%s5 + $0x148] sm:$0xff]
    %v596 = vld [vmem:[%s5 + $0x150] sm:$0xff]
    %v597 = vld [vmem:[%s5 + $0x158] sm:$0xff]
    %v598 = vld [vmem:[%s5 + $0x160] sm:$0xff]
    %v599 = vld [vmem:[%s5 + $0x168] sm:$0xff]
    %v600 = vld [vmem:[%s5 + $0x170] sm:$0xff]
    %v601 = vld [vmem:[%s5 + $0x178] sm:$0xff]
    %v602 = vld [vmem:[%s5 + $0x180] sm:$0xff]
    %v603 = vld [vmem:[%s5 + $0x188] sm:$0xff]
    %v604 = vld [vmem:[%s5 + $0x190] sm:$0xff]
    %v605 = vld [vmem:[%s5 + $0x198] sm:$0xff]
    %v606 = vld [vmem:[%s5 + $0x1a0] sm:$0xff]
    %v607 = vld [vmem:[%s5 + $0x1a8] sm:$0xff]
    %v608 = vld [vmem:[%s5 + $0x1b0] sm:$0xff]
    %v609 = vld [vmem:[%s5 + $0x1b8] sm:$0xff]
    %v610 = vld [vmem:[%s5 + $0x1c0] sm:$0xff]
    %v611 = vld [vmem:[%s5 + $0x1c8] sm:$0xff]
    %v612 = vld [vmem:[%s5 + $0x1d0] sm:$0xff]
    %v613 = vld [vmem:[%s5 + $0x1d8] sm:$0xff]
    %v614 = vld [vmem:[%s5 + $0x1e0] sm:$0xff]
    %v615 = vld [vmem:[%s5 + $0x1e8] sm:$0xff]
    %v616 = vld [vmem:[%s5 + $0x1f0] sm:$0xff]
    %v617 = vld [vmem:[%s5 + $0x1f8] sm:$0xff]
    %v618 = vld [vmem:[%s6] sm:$0x1]
    %v620 = vlaneseq
    %v621 = vshrl.u32 %v620, 7
    %v622 = vsub.s32 0, %v621
    %v623 = vrot.slane %v618, %v622
    %v633 = vsel %vm389, %v169, %v117
    %v634 = vsel %vm389, %v182, %v130
    %v635 = vsel %vm389, %v195, %v143
    %v636 = vsel %vm389, %v208, %v156
    %641 = vmatprep.subr.mxu0 0.0
    %642 = vmatpush1.msra.mxu0 %v554
    %643 = vmatprep.subr.mxu0 0.0
    %644 = vmatpush1.msra.mxu0 %v555
    %645 = vmatprep.subr.mxu0 0.0
    %646 = vmatpush1.msra.mxu0 %v556
    %647 = vmatprep.subr.mxu0 0.0
    %648 = vmatpush1.msra.mxu0 %v557
    %649 = vmatprep.subr.mxu0 0.0
    %650 = vmatpush1.msra.mxu0 %v558
    %651 = vmatprep.subr.mxu0 0.0
    %652 = vmatpush1.msra.mxu0 %v559
    %653 = vmatprep.subr.mxu0 0.0
    %654 = vmatpush1.msra.mxu0 %v560
    %655 = vmatprep.subr.mxu0 0.0
    %656 = vmatpush1.msra.mxu0 %v561
    %657 = vmatprep.subr.mxu0 0.0
    %658 = vmatpush1.msra.mxu0 %v562
    %659 = vmatprep.subr.mxu0 0.0
    %660 = vmatpush1.msra.mxu0 %v563
    %661 = vmatprep.subr.mxu0 0.0
    %662 = vmatpush1.msra.mxu0 %v564
    %663 = vmatprep.subr.mxu0 0.0
    %664 = vmatpush1.msra.mxu0 %v565
    %665 = vmatprep.subr.mxu0 0.0
    %666 = vmatpush1.msra.mxu0 %v566
    %667 = vmatprep.subr.mxu0 0.0
    %668 = vmatpush1.msra.mxu0 %v567
    %669 = vmatprep.subr.mxu0 0.0
    %670 = vmatpush1.msra.mxu0 %v568
    %671 = vmatprep.subr.mxu0 0.0
    %672 = vmatpush1.msra.mxu0 %v569
    %673 = vmatprep.subr.mxu0 0.0
    %674 = vmatpush1.msra.mxu0 %v570
    %675 = vmatprep.subr.mxu0 0.0
    %676 = vmatpush1.msra.mxu0 %v571
    %677 = vmatprep.subr.mxu0 0.0
    %678 = vmatpush1.msra.mxu0 %v572
    %679 = vmatprep.subr.mxu0 0.0
    %680 = vmatpush1.msra.mxu0 %v573
    %681 = vmatprep.subr.mxu0 0.0
    %682 = vmatpush1.msra.mxu0 %v574
    %683 = vmatprep.subr.mxu0 0.0
    %684 = vmatpush1.msra.mxu0 %v575
    %685 = vmatprep.subr.mxu0 0.0
    %686 = vmatpush1.msra.mxu0 %v576
    %687 = vmatprep.subr.mxu0 0.0
    %688 = vmatpush1.msra.mxu0 %v577
    %689 = vmatprep.subr.mxu0 0.0
    %690 = vmatpush1.msra.mxu0 %v578
    %691 = vmatprep.subr.mxu0 0.0
    %692 = vmatpush1.msra.mxu0 %v579
    %693 = vmatprep.subr.mxu0 0.0
    %694 = vmatpush1.msra.mxu0 %v580
    %695 = vmatprep.subr.mxu0 0.0
    %696 = vmatpush1.msra.mxu0 %v581
    %697 = vmatprep.subr.mxu0 0.0
    %698 = vmatpush1.msra.mxu0 %v582
    %699 = vmatprep.subr.mxu0 0.0
    %700 = vmatpush1.msra.mxu0 %v583
    %701 = vmatprep.subr.mxu0 0.0
    %702 = vmatpush1.msra.mxu0 %v584
    %703 = vmatprep.subr.mxu0 0.0
    %704 = vmatpush1.msra.mxu0 %v585
    %705 = vmatprep.mubr.f32.mxu0 %v634
    %706 = vmatmul.mubr.f32.gmra.mrb[0].mxu0 %v633
    %v707 = vpop.f32.mrb[0].mxu0
    %v708 = vadd.f32 %v623, %v707
    %v709 = vpop.f32.mrb[0].mxu0
    %710 = vdwg.mxu0
    %711 = vmatprep.subr.mxu0 0.0
    %712 = vmatpush1.msra.mxu0 %v586
    %713 = vmatprep.subr.mxu0 0.0
    %714 = vmatpush1.msra.mxu0 %v587
    %715 = vmatprep.subr.mxu0 0.0
    %716 = vmatpush1.msra.mxu0 %v588
    %717 = vmatprep.subr.mxu0 0.0
    %718 = vmatpush1.msra.mxu0 %v589
    %719 = vmatprep.subr.mxu0 0.0
    %720 = vmatpush1.msra.mxu0 %v590
    %721 = vmatprep.subr.mxu0 0.0
    %722 = vmatpush1.msra.mxu0 %v591
    %723 = vmatprep.subr.mxu0 0.0
    %724 = vmatpush1.msra.mxu0 %v592
    %725 = vmatprep.subr.mxu0 0.0
    %726 = vmatpush1.msra.mxu0 %v593
    %727 = vmatprep.subr.mxu0 0.0
    %728 = vmatpush1.msra.mxu0 %v594
    %729 = vmatprep.subr.mxu0 0.0
    %730 = vmatpush1.msra.mxu0 %v595
    %731 = vmatprep.subr.mxu0 0.0
    %732 = vmatpush1.msra.mxu0 %v596
    %733 = vmatprep.subr.mxu0 0.0
    %734 = vmatpush1.msra.mxu0 %v597
    %735 = vmatprep.subr.mxu0 0.0
    %736 = vmatpush1.msra.mxu0 %v598
    %737 = vmatprep.subr.mxu0 0.0
    %738 = vmatpush1.msra.mxu0 %v599
    %739 = vmatprep.subr.mxu0 0.0
    %740 = vmatpush1.msra.mxu0 %v600
    %741 = vmatprep.subr.mxu0 0.0
    %742 = vmatpush1.msra.mxu0 %v601
    %743 = vmatprep.subr.mxu0 0.0
    %744 = vmatpush1.msra.mxu0 %v602
    %745 = vmatprep.subr.mxu0 0.0
    %746 = vmatpush1.msra.mxu0 %v603
    %747 = vmatprep.subr.mxu0 0.0
    %748 = vmatpush1.msra.mxu0 %v604
    %749 = vmatprep.subr.mxu0 0.0
    %750 = vmatpush1.msra.mxu0 %v605
    %751 = vmatprep.subr.mxu0 0.0
    %752 = vmatpush1.msra.mxu0 %v606
    %753 = vmatprep.subr.mxu0 0.0
    %754 = vmatpush1.msra.mxu0 %v607
    %755 = vmatprep.subr.mxu0 0.0
    %756 = vmatpush1.msra.mxu0 %v608
    %757 = vmatprep.subr.mxu0 0.0
    %758 = vmatpush1.msra.mxu0 %v609
    %759 = vmatprep.subr.mxu0 0.0
    %760 = vmatpush1.msra.mxu0 %v610
    %761 = vmatprep.subr.mxu0 0.0
    %762 = vmatpush1.msra.mxu0 %v611
    %763 = vmatprep.subr.mxu0 0.0
    %764 = vmatpush1.msra.mxu0 %v612
    %765 = vmatprep.subr.mxu0 0.0
    %766 = vmatpush1.msra.mxu0 %v613
    %767 = vmatprep.subr.mxu0 0.0
    %768 = vmatpush1.msra.mxu0 %v614
    %769 = vmatprep.subr.mxu0 0.0
    %770 = vmatpush1.msra.mxu0 %v615
    %771 = vmatprep.subr.mxu0 0.0
    %772 = vmatpush1.msra.mxu0 %v616
    %773 = vmatprep.subr.mxu0 0.0
    %774 = vmatpush1.msra.mxu0 %v617
    %775 = vmatprep.mubr.f32.mxu0 %v636
    %776 = vmatmul.mubr.f32.gmra.mrb[0].mxu0 %v635
    %v777 = vpop.f32.mrb[0].mxu0
    %v778 = vadd.f32 %v708, %v777
    %v779 = vpop.f32.mrb[0].mxu0
    %780 = vdwg.mxu0
    %v781 = vmax.f32 %v778, 0.0
    %v782 = vld [vmem:[%s7] sm:$0xff]
    %v783 = vld [vmem:[%s7 + $0x8] sm:$0xff]
    %v784 = vld [vmem:[%s7 + $0x10] sm:$0xff]
    %v785 = vld [vmem:[%s7 + $0x18] sm:$0xff]
    %v786 = vld [vmem:[%s8] sm:$0x1]
    %v788 = vlaneseq
    %v789 = vshrl.u32 %v788, 7
    %v790 = vsub.s32 0, %v789
    %v791 = vrot.slane %v786, %v790
    %vm793 = vcmask 261120
    %v795 = vsel %vm793, %v781, 0
    %797 = vmatprep.subr.mxu0 0.0
    %798 = vmatpush1.msra.mxu0 %v782
    %799 = vmatprep.subr.mxu0 0.0
    %800 = vmatpush1.msra.mxu0 %v783
    %801 = vmatprep.subr.mxu0 0.0
    %802 = vmatpush1.msra.mxu0 %v784
    %803 = vmatprep.subr.mxu0 0.0
    %804 = vmatpush1.msra.mxu0 %v785
    %805 = vmatprep.subr.mxu0 0.0
    %806 = vmatpush1.msra.mxu0 0.0
    %807 = vmatprep.subr.mxu0 0.0
    %808 = vmatpush1.msra.mxu0 0.0
    %809 = vmatprep.subr.mxu0 0.0
    %810 = vmatpush1.msra.mxu0 0.0
    %811 = vmatprep.subr.mxu0 0.0
    %812 = vmatpush1.msra.mxu0 0.0
    %813 = vmatprep.subr.mxu0 0.0
    %814 = vmatpush1.msra.mxu0 0.0
    %815 = vmatprep.subr.mxu0 0.0
    %816 = vmatpush1.msra.mxu0 0.0
    %817 = vmatprep.subr.mxu0 0.0
    %818 = vmatpush1.msra.mxu0 0.0
    %819 = vmatprep.subr.mxu0 0.0
    %820 = vmatpush1.msra.mxu0 0.0
    %821 = vmatprep.subr.mxu0 0.0
    %822 = vmatpush1.msra.mxu0 0.0
    %823 = vmatprep.subr.mxu0 0.0
    %824 = vmatpush1.msra.mxu0 0.0
    %825 = vmatprep.subr.mxu0 0.0
    %826 = vmatpush1.msra.mxu0 0.0
    %827 = vmatprep.subr.mxu0 0.0
    %828 = vmatpush1.msra.mxu0 0.0
    %829 = vmatprep.subr.mxu0 0.0
    %830 = vmatpush1.msra.mxu0 0.0
    %831 = vmatprep.subr.mxu0 0.0
    %832 = vmatpush1.msra.mxu0 0.0
    %833 = vmatprep.subr.mxu0 0.0
    %834 = vmatpush1.msra.mxu0 0.0
    %835 = vmatprep.subr.mxu0 0.0
    %836 = vmatpush1.msra.mxu0 0.0
    %837 = vmatprep.subr.mxu0 0.0
    %838 = vmatpush1.msra.mxu0 0.0
    %839 = vmatprep.subr.mxu0 0.0
    %840 = vmatpush1.msra.mxu0 0.0
    %841 = vmatprep.subr.mxu0 0.0
    %842 = vmatpush1.msra.mxu0 0.0
    %843 = vmatprep.subr.mxu0 0.0
    %844 = vmatpush1.msra.mxu0 0.0
    %845 = vmatprep.subr.mxu0 0.0
    %846 = vmatpush1.msra.mxu0 0.0
    %847 = vmatprep.subr.mxu0 0.0
    %848 = vmatpush1.msra.mxu0 0.0
    %849 = vmatprep.subr.mxu0 0.0
    %850 = vmatpush1.msra.mxu0 0.0
    %851 = vmatprep.subr.mxu0 0.0
    %852 = vmatpush1.msra.mxu0 0.0
    %853 = vmatprep.subr.mxu0 0.0
    %854 = vmatpush1.msra.mxu0 0.0
    %855 = vmatprep.subr.mxu0 0.0
    %856 = vmatpush1.msra.mxu0 0.0
    %857 = vmatprep.subr.mxu0 0.0
    %858 = vmatpush1.msra.mxu0 0.0
    %859 = vmatprep.subr.mxu0 0.0
    %860 = vmatpush1.msra.mxu0 0.0
    %861 = vmatprep.mubr.f32.mxu0 0.0
    %862 = vmatmul.mubr.f32.gmra.mrb[0].mxu0 %v795
    %v863 = vpop.f32.mrb[0].mxu0
    %v864 = vadd.f32 %v791, %v863
    %v865 = vpop.f32.mrb[0].mxu0
    %866 = vdwg.mxu0
    %v867 = vld [vmem:[%s9] sm:$0x7]
    %v868 = vld [vmem:[%s10] sm:$0x7]
    %vm869 = vcmask 23552
    %v871 = vsel %vm869, %v551, 0
    %vm873 = vcmask 1042432
    %v875 = vsel %vm873, %v868, 0
    %877 = vmatprep.subr.mxu0 0.0
    %878 = vmatpush1.msra.mxu0 %v875
    %879 = vmatprep.subr.mxu0 0.0
    %880 = vmatpush1.msra.mxu0 0.0
    %881 = vmatprep.subr.mxu0 0.0
    %882 = vmatpush1.msra.mxu0 0.0
    %883 = vmatprep.subr.mxu0 0.0
    %884 = vmatpush1.msra.mxu0 0.0
    %885 = vmatprep.subr.mxu0 0.0
    %886 = vmatpush1.msra.mxu0 0.0
    %887 = vmatprep.subr.mxu0 0.0
    %888 = vmatpush1.msra.mxu0 0.0
    %889 = vmatprep.subr.mxu0 0.0
    %890 = vmatpush1.msra.mxu0 0.0
    %891 = vmatprep.subr.mxu0 0.0
    %892 = vmatpush1.msra.mxu0 0.0
    %893 = vmatprep.subr.mxu0 0.0
    %894 = vmatpush1.msra.mxu0 0.0
    %895 = vmatprep.subr.mxu0 0.0
    %896 = vmatpush1.msra.mxu0 0.0
    %897 = vmatprep.subr.mxu0 0.0
    %898 = vmatpush1.msra.mxu0 0.0
    %899 = vmatprep.subr.mxu0 0.0
    %900 = vmatpush1.msra.mxu0 0.0
    %901 = vmatprep.subr.mxu0 0.0
    %902 = vmatpush1.msra.mxu0 0.0
    %903 = vmatprep.subr.mxu0 0.0
    %904 = vmatpush1.msra.mxu0 0.0
    %905 = vmatprep.subr.mxu0 0.0
    %906 = vmatpush1.msra.mxu0 0.0
    %907 = vmatprep.subr.mxu0 0.0
    %908 = vmatpush1.msra.mxu0 0.0
    %909 = vmatprep.subr.mxu0 0.0
    %910 = vmatpush1.msra.mxu0 0.0
    %911 = vmatprep.subr.mxu0 0.0
    %912 = vmatpush1.msra.mxu0 0.0
    %913 = vmatprep.subr.mxu0 0.0
    %914 = vmatpush1.msra.mxu0 0.0
    %915 = vmatprep.subr.mxu0 0.0
    %916 = vmatpush1.msra.mxu0 0.0
    %917 = vmatprep.subr.mxu0 0.0
    %918 = vmatpush1.msra.mxu0 0.0
    %919 = vmatprep.subr.mxu0 0.0
    %920 = vmatpush1.msra.mxu0 0.0
    %921 = vmatprep.subr.mxu0 0.0
    %922 = vmatpush1.msra.mxu0 0.0
    %923 = vmatprep.subr.mxu0 0.0
    %924 = vmatpush1.msra.mxu0 0.0
    %925 = vmatprep.subr.mxu0 0.0
    %926 = vmatpush1.msra.mxu0 0.0
    %927 = vmatprep.subr.mxu0 0.0
    %928 = vmatpush1.msra.mxu0 0.0
    %929 = vmatprep.subr.mxu0 0.0
    %930 = vmatpush1.msra.mxu0 0.0
    %931 = vmatprep.subr.mxu0 0.0
    %932 = vmatpush1.msra.mxu0 0.0
    %933 = vmatprep.subr.mxu0 0.0
    %934 = vmatpush1.msra.mxu0 0.0
    %935 = vmatprep.subr.mxu0 0.0
    %936 = vmatpush1.msra.mxu0 0.0
    %937 = vmatprep.subr.mxu0 0.0
    %938 = vmatpush1.msra.mxu0 0.0
    %939 = vmatprep.subr.mxu0 0.0
    %940 = vmatpush1.msra.mxu0 0.0
    %941 = vmatprep.mubr.f32.mxu0 0.0
    %942 = vmatmul.mubr.f32.gmra.mrb[0].mxu0 %v871
    %v943 = vpop.f32.mrb[0].mxu0
    %v944 = vadd.f32 0.0, %v943
    %v945 = vpop.f32.mrb[0].mxu0
    %946 = vdwg.mxu0
    %v948 = vsel %vm869, %v864, 0
    %v951 = vsel %vm873, %v867, 0
    %953 = vmatprep.subr.mxu0 0.0
    %954 = vmatpush1.msra.mxu0 %v951
    %955 = vmatprep.subr.mxu0 0.0
    %956 = vmatpush1.msra.mxu0 0.0
    %957 = vmatprep.subr.mxu0 0.0
    %958 = vmatpush1.msra.mxu0 0.0
    %959 = vmatprep.subr.mxu0 0.0
    %960 = vmatpush1.msra.mxu0 0.0
    %961 = vmatprep.subr.mxu0 0.0
    %962 = vmatpush1.msra.mxu0 0.0
    %963 = vmatprep.subr.mxu0 0.0
    %964 = vmatpush1.msra.mxu0 0.0
    %965 = vmatprep.subr.mxu0 0.0
    %966 = vmatpush1.msra.mxu0 0.0
    %967 = vmatprep.subr.mxu0 0.0
    %968 = vmatpush1.msra.mxu0 0.0
    %969 = vmatprep.subr.mxu0 0.0
    %970 = vmatpush1.msra.mxu0 0.0
    %971 = vmatprep.subr.mxu0 0.0
    %972 = vmatpush1.msra.mxu0 0.0
    %973 = vmatprep.subr.mxu0 0.0
    %974 = vmatpush1.msra.mxu0 0.0
    %975 = vmatprep.subr.mxu0 0.0
    %976 = vmatpush1.msra.mxu0 0.0
    %977 = vmatprep.subr.mxu0 0.0
    %978 = vmatpush1.msra.mxu0 0.0
    %979 = vmatprep.subr.mxu0 0.0
    %980 = vmatpush1.msra.mxu0 0.0
    %981 = vmatprep.subr.mxu0 0.0
    %982 = vmatpush1.msra.mxu0 0.0
    %983 = vmatprep.subr.mxu0 0.0
    %984 = vmatpush1.msra.mxu0 0.0
    %985 = vmatprep.subr.mxu0 0.0
    %986 = vmatpush1.msra.mxu0 0.0
    %987 = vmatprep.subr.mxu0 0.0
    %988 = vmatpush1.msra.mxu0 0.0
    %989 = vmatprep.subr.mxu0 0.0
    %990 = vmatpush1.msra.mxu0 0.0
    %991 = vmatprep.subr.mxu0 0.0
    %992 = vmatpush1.msra.mxu0 0.0
    %993 = vmatprep.subr.mxu0 0.0
    %994 = vmatpush1.msra.mxu0 0.0
    %995 = vmatprep.subr.mxu0 0.0
    %996 = vmatpush1.msra.mxu0 0.0
    %997 = vmatprep.subr.mxu0 0.0
    %998 = vmatpush1.msra.mxu0 0.0
    %999 = vmatprep.subr.mxu0 0.0
    %1000 = vmatpush1.msra.mxu0 0.0
    %1001 = vmatprep.subr.mxu0 0.0
    %1002 = vmatpush1.msra.mxu0 0.0
    %1003 = vmatprep.subr.mxu0 0.0
    %1004 = vmatpush1.msra.mxu0 0.0
    %1005 = vmatprep.subr.mxu0 0.0
    %1006 = vmatpush1.msra.mxu0 0.0
    %1007 = vmatprep.subr.mxu0 0.0
    %1008 = vmatpush1.msra.mxu0 0.0
    %1009 = vmatprep.subr.mxu0 0.0
    %1010 = vmatpush1.msra.mxu0 0.0
    %1011 = vmatprep.subr.mxu0 0.0
    %1012 = vmatpush1.msra.mxu0 0.0
    %1013 = vmatprep.subr.mxu0 0.0
    %1014 = vmatpush1.msra.mxu0 0.0
    %1015 = vmatprep.subr.mxu0 0.0
    %1016 = vmatpush1.msra.mxu0 0.0
    %1017 = vmatprep.mubr.f32.mxu0 0.0
    %1018 = vmatmul.mubr.f32.gmra.mrb[0].mxu0 %v948
    %v1019 = vpop.f32.mrb[0].mxu0
    %v1020 = vadd.f32 %v944, %v1019
    %v1021 = vpop.f32.mrb[0].mxu0
    %1022 = vdwg.mxu0
    %v1023 = vld [vmem:[%s11] sm:$0x1]
    %v1025 = vlaneseq
    %v1026 = vshrl.u32 %v1025, 7
    %v1027 = vsub.s32 0, %v1026
    %v1028 = vrot.slane %v1023, %v1027
    %v1030 = vadd.f32 %v1020, %v1028
    %v1031 = vmax.f32 %v1030, 0.0
    %v1032 = vld [vmem:[%s12] sm:$0x7]
    %v1033 = vld [vmem:[%s13] sm:$0x1]
    %v1035 = vlaneseq
    %v1036 = vshrl.u32 %v1035, 7
    %v1037 = vsub.s32 0, %v1036
    %v1038 = vrot.slane %v1033, %v1037
    %v1041 = vsel %vm869, %v1031, 0
    %v1044 = vsel %vm873, %v1032, 0
    %1046 = vmatprep.subr.mxu0 0.0
    %1047 = vmatpush1.msra.mxu0 %v1044
    %1048 = vmatprep.subr.mxu0 0.0
    %1049 = vmatpush1.msra.mxu0 0.0
    %1050 = vmatprep.subr.mxu0 0.0
    %1051 = vmatpush1.msra.mxu0 0.0
    %1052 = vmatprep.subr.mxu0 0.0
    %1053 = vmatpush1.msra.mxu0 0.0
    %1054 = vmatprep.subr.mxu0 0.0
    %1055 = vmatpush1.msra.mxu0 0.0
    %1056 = vmatprep.subr.mxu0 0.0
    %1057 = vmatpush1.msra.mxu0 0.0
    %1058 = vmatprep.subr.mxu0 0.0
    %1059 = vmatpush1.msra.mxu0 0.0
    %1060 = vmatprep.subr.mxu0 0.0
    %1061 = vmatpush1.msra.mxu0 0.0
    %1062 = vmatprep.subr.mxu0 0.0
    %1063 = vmatpush1.msra.mxu0 0.0
    %1064 = vmatprep.subr.mxu0 0.0
    %1065 = vmatpush1.msra.mxu0 0.0
    %1066 = vmatprep.subr.mxu0 0.0
    %1067 = vmatpush1.msra.mxu0 0.0
    %1068 = vmatprep.subr.mxu0 0.0
    %1069 = vmatpush1.msra.mxu0 0.0
    %1070 = vmatprep.subr.mxu0 0.0
    %1071 = vmatpush1.msra.mxu0 0.0
    %1072 = vmatprep.subr.mxu0 0.0
    %1073 = vmatpush1.msra.mxu0 0.0
    %1074 = vmatprep.subr.mxu0 0.0
    %1075 = vmatpush1.msra.mxu0 0.0
    %1076 = vmatprep.subr.mxu0 0.0
    %1077 = vmatpush1.msra.mxu0 0.0
    %1078 = vmatprep.subr.mxu0 0.0
    %1079 = vmatpush1.msra.mxu0 0.0
    %1080 = vmatprep.subr.mxu0 0.0
    %1081 = vmatpush1.msra.mxu0 0.0
    %1082 = vmatprep.subr.mxu0 0.0
    %1083 = vmatpush1.msra.mxu0 0.0
    %1084 = vmatprep.subr.mxu0 0.0
    %1085 = vmatpush1.msra.mxu0 0.0
    %1086 = vmatprep.subr.mxu0 0.0
    %1087 = vmatpush1.msra.mxu0 0.0
    %1088 = vmatprep.subr.mxu0 0.0
    %1089 = vmatpush1.msra.mxu0 0.0
    %1090 = vmatprep.subr.mxu0 0.0
    %1091 = vmatpush1.msra.mxu0 0.0
    %1092 = vmatprep.subr.mxu0 0.0
    %1093 = vmatpush1.msra.mxu0 0.0
    %1094 = vmatprep.subr.mxu0 0.0
    %1095 = vmatpush1.msra.mxu0 0.0
    %1096 = vmatprep.subr.mxu0 0.0
    %1097 = vmatpush1.msra.mxu0 0.0
    %1098 = vmatprep.subr.mxu0 0.0
    %1099 = vmatpush1.msra.mxu0 0.0
    %1100 = vmatprep.subr.mxu0 0.0
    %1101 = vmatpush1.msra.mxu0 0.0
    %1102 = vmatprep.subr.mxu0 0.0
    %1103 = vmatpush1.msra.mxu0 0.0
    %1104 = vmatprep.subr.mxu0 0.0
    %1105 = vmatpush1.msra.mxu0 0.0
    %1106 = vmatprep.subr.mxu0 0.0
    %1107 = vmatpush1.msra.mxu0 0.0
    %1108 = vmatprep.subr.mxu0 0.0
    %1109 = vmatpush1.msra.mxu0 0.0
    %1110 = vmatprep.mubr.f32.mxu0 0.0
    %1111 = vmatmul.mubr.f32.gmra.mrb[0].mxu0 %v1041
    %v1112 = vpop.f32.mrb[0].mxu0
    %v1113 = vadd.f32 %v1038, %v1112
    %v1114 = vpop.f32.mrb[0].mxu0
    %1115 = vdwg.mxu0
    %vm1116 = vcmask 17408
    %v1117 = vsel %vm1116, %v1113, -inf
    %1118 = vmax.xlane.f32.xlu0 %v1117
    %v1119 = vpop.xlane.xlu0 %1118
    %v1120 = vsub.f32 %v1113, %v1119
    %v1121 = vmul.f32 %v1120, 1.442695
    %v1122 = vpow.pop %v1121
    %v1123 = vsel %vm1116, %v1122, 0.0
    %1124 = vadd.xlane.f32.xlu0 %v1123
    %v1125 = vpop.xlane.xlu0 %1124
    %v1126 = vrcp.pop %v1125
    %v1127 = vmul.f32 %v1122, %v1126
    %1128 = vst.msk [vmem:[#allocation2] sm:$0x3] %vm1116, %v1127
    // Predicated region
    $region58: #{router_forward.1} parent=1 // pred_check
      _
    $region59: #{router_forward.1} parent=1 // pred_check_branch
      %1130 = sbr.rel (0) target = $region61
    $region60: #{router_forward.1} parent=1 // pred_region
      %s1132 = ssub.s32 32, 32
      %1133 = vsyncadd [#allocation3], %s1132
      %s1135 = sshll.u32 [#allocation2], 4
      %s1136 = int_to_ptr.vmem [resolvable:$true] %s1135
      %1138 = dma.vmem_to_hbm [thread:$0]  %s1136, 32, %s14, [#allocation3]
    $region61: #{router_forward.1} parent=1 // pred_fallthru
      _
    // Predicated region
    $region62: #{router_forward.1} parent=1 // pred_check
      _
    $region63: #{router_forward.1} parent=1 // pred_check_branch
      %1140 = sbr.rel (0) target = $region65
    $region64: #{router_forward.1} parent=1 // pred_region
      %1141 = dma.done [#allocation3], 32
    $region65: #{router_forward.1} parent=1 // pred_fallthru
      _
    %1142 = vsyncpa [#allocation3], 1

</llo_original>
